<compile_context>
chip_gen: v7x
topology: tpu7x:2x2x1
jax: 0.10.0
libtpu: 0.0.40
codegen_flags: <defaults>
</compile_context>

<pallas_src>
import jax
import jax.numpy as jnp
from jax.experimental import pallas as pl
from jax.experimental.pallas import tpu as pltpu


def _round_up(a, m):
    return ((a + m - 1) // m) * m


def _cnn_kernel(x_ref, wf_ref, bf_ref, w2_ref, b2_ref, out_ref):
    # x_ref : [TM, 3*C_in]  bf16   (im2col'd input rows, B*L flattened into M)
    # wf_ref: [3*C_in, 64]  bf16   (conv folded into layer1)
    # bf_ref: [1, 64]       f32    (folded bias)
    # w2_ref: [64, C_out]   bf16
    # b2_ref: [1, C_out]    f32
    # out_ref:[TM, C_out]   f32    (true-width output, no lane padding)

    # fused conv(k=3) + layer1: single K=3*C_in matmul, bias, ReLU
    h = jnp.dot(x_ref[...], wf_ref[...], preferred_element_type=jnp.float32)
    h = jnp.maximum(h + bf_ref[...], 0.0)

    # layer2 + ReLU
    o = jnp.dot(h.astype(w2_ref.dtype), w2_ref[...],
                preferred_element_type=jnp.float32)
    o = jnp.maximum(o + b2_ref[...], 0.0)
    out_ref[...] = o.astype(out_ref.dtype)


def cnn_forward(x, w_conv, b_conv, w1, b1, w2, b2):
    """x: [B, L, enc_in] f32; conv weight torch layout [64, enc_in, 3].
    Returns [B, L, c_out] f32."""
    B, L, C_in = x.shape
    C_mid = w1.shape[0]          # 64
    C_out = w2.shape[1]
    K = 3 * C_in

    # ---- im2col in bf16 (halo via pad=1 on the seq axis), flatten B*L ----
    x_bf = x.astype(jnp.bfloat16)
    x_pad = jnp.pad(x_bf, ((0, 0), (1, 1), (0, 0)))          # [B, L+2, C_in]
    x_unf = jnp.concatenate(
        [x_pad[:, 0:L], x_pad[:, 1:L + 1], x_pad[:, 2:L + 2]], axis=-1)
    x_unf = x_unf.reshape(B * L, K)                           # [M, 3*C_in] bf16
    # TODO(synk): the im2col could be moved inside the kernel with halo reads
    # to avoid the 3x read amplification; secondary since output bytes and
    # per-step overhead dominate at these channel counts.

    # ---- fold conv into layer1 (exact: no nonlinearity between them) ----
    wc_flat = jnp.transpose(w_conv, (2, 1, 0)).reshape(K, C_mid)  # [3*C_in,64]
    wf = (wc_flat @ w1).astype(jnp.bfloat16)                      # [3*C_in,64]
    bf = (b_conv @ w1 + b1).reshape(1, C_mid).astype(jnp.float32)
    w2_bf = w2.astype(jnp.bfloat16)                               # [64, C_out]
    b2f = b2.reshape(1, C_out).astype(jnp.float32)

    # ---- M tiling ----
    # small M: 1 block (no per-step overhead); large M: >=4 blocks so the
    # software pipeline hides DMA on single-TC chips and both v7x TCs get
    # work.  TM rounded to 16 (bf16 sublane packing), capped at 8192 rows.
    M = B * L
    num_blocks = 1 if M <= 2048 else 4
    TM = min(_round_up(pl.cdiv(M, num_blocks), 16), 8192)
    num_blocks = pl.cdiv(M, TM)
    M_pad = num_blocks * TM
    if M_pad != M:
        x_unf = jnp.pad(x_unf, ((0, M_pad - M), (0, 0)))

    cost = pl.CostEstimate(
        flops=2 * M_pad * K * C_mid + 2 * M_pad * C_mid * C_out,
        transcendentals=0,
        bytes_accessed=(x_unf.size * 2 + wf.size * 2 + bf.size * 4
                        + w2_bf.size * 2 + b2f.size * 4
                        + M_pad * C_out * 4))

    out_pad = pl.pallas_call(
        _cnn_kernel,
        out_shape=jax.ShapeDtypeStruct((M_pad, C_out), jnp.float32),
        grid_spec=pltpu.PrefetchScalarGridSpec(
            num_scalar_prefetch=0,
            grid=(num_blocks,),
            in_specs=[
                pl.BlockSpec((TM, K), lambda i: (i, 0)),
                pl.BlockSpec((K, C_mid), lambda i: (0, 0)),
                pl.BlockSpec((1, C_mid), lambda i: (0, 0)),
                pl.BlockSpec((C_mid, C_out), lambda i: (0, 0)),
                pl.BlockSpec((1, C_out), lambda i: (0, 0)),
            ],
            out_specs=pl.BlockSpec((TM, C_out), lambda i: (i, 0)),
        ),
        compiler_params=pltpu.CompilerParams(
            dimension_semantics=("parallel",)),
        cost_estimate=cost,
    )(x_unf, wf, bf, w2_bf, b2f)

    if M_pad != M:
        out_pad = out_pad[:M]
    return out_pad.reshape(B, L, C_out)


def reference_forward(x, w_conv, b_conv, w1, b1, w2, b2):
    """Pure-JAX f32 reference matching the PyTorch module semantics."""
    L = x.shape[1]
    x_pad = jnp.pad(x, ((0, 0), (1, 1), (0, 0)))
    wc = jnp.transpose(w_conv, (2, 1, 0))  # [k, in, out]
    conv = (x_pad[:, 0:L] @ wc[0] + x_pad[:, 1:L + 1] @ wc[1]
            + x_pad[:, 2:L + 2] @ wc[2]) + b_conv
    h = jnp.maximum(conv @ w1 + b1, 0.0)
    o = jnp.maximum(h @ w2 + b2, 0.0)
    return o


if __name__ == "__main__":
    # Small shapes consistent with the module: enc_in=8, c_out=4, B=2, L=16.
    B, L, ENC_IN, C_MID, C_OUT = 2, 16, 8, 64, 4
    key = jax.random.PRNGKey(0)
    ks = jax.random.split(key, 8)

    x = jax.random.normal(ks[0], (B, L, ENC_IN), dtype=jnp.float32)
    # Deterministic parameter init (uniform, roughly matching torch fan-in scaling).
    w_conv = jax.random.uniform(ks[1], (C_MID, ENC_IN, 3), jnp.float32,
                                -0.2, 0.2)
    b_conv = jax.random.uniform(ks[2], (C_MID,), jnp.float32, -0.2, 0.2)
    w1 = jax.random.uniform(ks[3], (C_MID, C_MID), jnp.float32, -0.125, 0.125)
    b1 = jax.random.uniform(ks[4], (C_MID,), jnp.float32, -0.125, 0.125)
    w2 = jax.random.uniform(ks[5], (C_MID, C_OUT), jnp.float32, -0.125, 0.125)
    b2 = jax.random.uniform(ks[6], (C_OUT,), jnp.float32, -0.125, 0.125)

    out = cnn_forward(x, w_conv, b_conv, w1, b1, w2, b2)
    out = jax.block_until_ready(out)

    ref = reference_forward(x, w_conv, b_conv, w1, b1, w2, b2)
    assert out.shape == (B, L, C_OUT)
    # bf16 MXU operands with f32 accumulation -> ~1e-2-level deviation from
    # the pure-f32 reference is expected.
    assert jnp.allclose(out, ref, atol=5e-2, rtol=5e-2)
    print("KERNEL_OK")
</pallas_src>

<mosaic_0001>
module attributes {stable_mosaic.version = 11 : i64} {
  func.func @_cnn_kernel(%arg0: i32, %arg1: memref<32x24xbf16, #tpu.memory_space<vmem>>, %arg2: memref<24x64xbf16, #tpu.memory_space<vmem>>, %arg3: memref<1x64xf32, #tpu.memory_space<vmem>>, %arg4: memref<64x4xbf16, #tpu.memory_space<vmem>>, %arg5: memref<1x4xf32, #tpu.memory_space<vmem>>, %arg6: memref<32x4xf32, #tpu.memory_space<vmem>>) attributes {dimension_semantics = [#tpu.dimension_semantics<parallel>], iteration_bounds = array<i64: 1>, scalar_prefetch = 0 : i64, scratch_operands = 0 : i64, tpu.core_type = #tpu.core_type<tc>, window_params = [{transform_indices = @transform_0, window_bounds = array<i64: 32, 24>}, {pipeline_mode = #tpu.pipeline_mode<synchronous>, transform_indices = @transform_1, window_bounds = array<i64: 24, 64>}, {pipeline_mode = #tpu.pipeline_mode<synchronous>, transform_indices = @transform_2, window_bounds = array<i64: 1, 64>}, {pipeline_mode = #tpu.pipeline_mode<synchronous>, transform_indices = @transform_3, window_bounds = array<i64: 64, 4>}, {pipeline_mode = #tpu.pipeline_mode<synchronous>, transform_indices = @transform_4, window_bounds = array<i64: 1, 4>}, {transform_indices = @transform_5, window_bounds = array<i64: 32, 4>}]} {
    %c0 = arith.constant 0 : index
    %c0_0 = arith.constant 0 : index
    %0 = vector.load %arg1[%c0, %c0_0] : memref<32x24xbf16, #tpu.memory_space<vmem>>, vector<32x24xbf16>
    %c0_1 = arith.constant 0 : index
    %c0_2 = arith.constant 0 : index
    %1 = vector.load %arg2[%c0_1, %c0_2] : memref<24x64xbf16, #tpu.memory_space<vmem>>, vector<24x64xbf16>
    %cst = arith.constant dense<0.000000e+00> : vector<32x64xf32>
    %2 = tpu.matmul %0, %1, %cst {dimension_numbers = #tpu.dot_dimension_numbers<[1], [0], [0], [1], [0, 0, 1, 1], [], []>} : vector<32x24xbf16>, vector<24x64xbf16>, vector<32x64xf32> -> vector<32x64xf32>
    %c0_3 = arith.constant 0 : index
    %c0_4 = arith.constant 0 : index
    %3 = vector.load %arg3[%c0_3, %c0_4] : memref<1x64xf32, #tpu.memory_space<vmem>>, vector<1x64xf32>
    %4 = vector.broadcast %3 : vector<1x64xf32> to vector<32x64xf32>
    %5 = arith.addf %2, %4 : vector<32x64xf32>
    %cst_5 = arith.constant 0.000000e+00 : f32
    %6 = vector.broadcast %cst_5 : f32 to vector<32x64xf32>
    %7 = arith.maximumf %5, %6 : vector<32x64xf32>
    %8 = arith.truncf %7 : vector<32x64xf32> to vector<32x64xbf16>
    %c0_6 = arith.constant 0 : index
    %c0_7 = arith.constant 0 : index
    %9 = vector.load %arg4[%c0_6, %c0_7] : memref<64x4xbf16, #tpu.memory_space<vmem>>, vector<64x4xbf16>
    %cst_8 = arith.constant dense<0.000000e+00> : vector<32x4xf32>
    %10 = tpu.matmul %8, %9, %cst_8 {dimension_numbers = #tpu.dot_dimension_numbers<[1], [0], [0], [1], [0, 0, 1, 1], [], []>} : vector<32x64xbf16>, vector<64x4xbf16>, vector<32x4xf32> -> vector<32x4xf32>
    %c0_9 = arith.constant 0 : index
    %c0_10 = arith.constant 0 : index
    %11 = vector.load %arg5[%c0_9, %c0_10] : memref<1x4xf32, #tpu.memory_space<vmem>>, vector<1x4xf32>
    %12 = vector.broadcast %11 : vector<1x4xf32> to vector<32x4xf32>
    %13 = arith.addf %10, %12 : vector<32x4xf32>
    %cst_11 = arith.constant 0.000000e+00 : f32
    %14 = vector.broadcast %cst_11 : f32 to vector<32x4xf32>
    %15 = arith.maximumf %13, %14 : vector<32x4xf32>
    %c0_12 = arith.constant 0 : index
    %c0_13 = arith.constant 0 : index
    %16 = vector.load %arg6[%c0_12, %c0_13] : memref<32x4xf32, #tpu.memory_space<vmem>>, vector<32x4xf32>
    tpu.vector_store %arg6[%c0_12, %c0_13], %15 {strides = array<i32>} : memref<32x4xf32, #tpu.memory_space<vmem>>, vector<32x4xf32>,
    return
  }
  func.func @transform_0(%arg0: i32) -> (i32, i32) {
    %c0_i32 = arith.constant 0 : i32
    %c0_i32_0 = arith.constant 0 : i32
    return %arg0, %c0_i32 : i32, i32
  }
  func.func @transform_1(%arg0: i32) -> (i32, i32) {
    %c0_i32 = arith.constant 0 : i32
    %c0_i32_0 = arith.constant 0 : i32
    %c0_i32_1 = arith.constant 0 : i32
    return %c0_i32, %c0_i32_0 : i32, i32
  }
  func.func @transform_2(%arg0: i32) -> (i32, i32) {
    %c0_i32 = arith.constant 0 : i32
    %c0_i32_0 = arith.constant 0 : i32
    %c0_i32_1 = arith.constant 0 : i32
    return %c0_i32, %c0_i32_0 : i32, i32
  }
  func.func @transform_3(%arg0: i32) -> (i32, i32) {
    %c0_i32 = arith.constant 0 : i32
    %c0_i32_0 = arith.constant 0 : i32
    %c0_i32_1 = arith.constant 0 : i32
    return %c0_i32, %c0_i32_0 : i32, i32
  }
  func.func @transform_4(%arg0: i32) -> (i32, i32) {
    %c0_i32 = arith.constant 0 : i32
    %c0_i32_0 = arith.constant 0 : i32
    %c0_i32_1 = arith.constant 0 : i32
    return %c0_i32, %c0_i32_0 : i32, i32
  }
  func.func @transform_5(%arg0: i32) -> (i32, i32) {
    %c0_i32 = arith.constant 0 : i32
    %c0_i32_0 = arith.constant 0 : i32
    return %arg0, %c0_i32 : i32, i32
  }
}

</mosaic_0001>

<llo_original>
// kernel: tpu_custom_call.1
$region0: #{tpu_custom_call.1}
  #allocation0 [shape = 'u32[]', space=smem, size = 0x4, offset = 0x4, fixed_abs, tag = 'smem constant byte address 0x4 - core index']
  #allocation1 [shape = 'u32[144,128]{1,0:T(1,128)}', space=vmem, size = 0x12000, scoped, tag = 'internal scratch']
  %s0 = inlined_call_operand.vmem [shape: bf16[32,24], index: 0, kind: input, shape index: {}]
  %s1 = inlined_call_operand.vmem [shape: bf16[24,64], index: 1, kind: input, shape index: {}]
  %s2 = inlined_call_operand.vmem [shape: f32[1,64], index: 2, kind: input, shape index: {}]
  %s3 = inlined_call_operand.vmem [shape: bf16[64,4], index: 3, kind: input, shape index: {}]
  %s4 = inlined_call_operand.vmem [shape: f32[1,4], index: 4, kind: input, shape index: {}]
  %s5 = inlined_call_operand.vmem [shape: f32[32,4], index: 5, kind: output, shape index: {}]
  %s6 = sld [smem:[#allocation0]]
  $region30: #{tpu_custom_call.1} parent=0
    _
  %s8 = ssub.s32 1, %s6
  %s9 = scalar_select 0, %s8, %s6
  // Predicated region
  $region2: #{tpu_custom_call.1} parent=0 // pred_check
    _
  $region3: #{tpu_custom_call.1} parent=0 // pred_check_branch
    %11 = sbr.rel (0) target = $region5
  $region4: #{tpu_custom_call.1} parent=0 // pred_region
    _
  $region5: #{tpu_custom_call.1} parent=0 // pred_fallthru
    _
  // Predicated region
  $region6: #{tpu_custom_call.1} parent=0 // pred_check
    _
  $region7: #{tpu_custom_call.1} parent=0 // pred_check_branch
    %13 = sbr.rel (0) target = $region9
  $region8: #{tpu_custom_call.1} parent=0 // pred_region
    _
  $region9: #{tpu_custom_call.1} parent=0 // pred_fallthru
    _
  // Predicated region
  $region10: #{tpu_custom_call.1} parent=0 // pred_check
    _
  $region11: #{tpu_custom_call.1} parent=0 // pred_check_branch
    %15 = sbr.rel (0) target = $region13
  $region12: #{tpu_custom_call.1} parent=0 // pred_region
    _
  $region13: #{tpu_custom_call.1} parent=0 // pred_fallthru
    _
  // Predicated region
  $region14: #{tpu_custom_call.1} parent=0 // pred_check
    _
  $region15: #{tpu_custom_call.1} parent=0 // pred_check_branch
    %17 = sbr.rel (0) target = $region17
  $region16: #{tpu_custom_call.1} parent=0 // pred_region
    _
  $region17: #{tpu_custom_call.1} parent=0 // pred_fallthru
    _
  // Predicated region
  $region18: #{tpu_custom_call.1} parent=0 // pred_check
    _
  $region19: #{tpu_custom_call.1} parent=0 // pred_check_branch
    %19 = sbr.rel (0) target = $region21
  $region20: #{tpu_custom_call.1} parent=0 // pred_region
    _
  $region21: #{tpu_custom_call.1} parent=0 // pred_fallthru
    _
  %v21 = vld [vmem:[%s0] sm:$0xf]
  %v22 = vld [vmem:[%s0 + $0x4] sm:$0xf]
  %v23 = vld [vmem:[%s0 + $0x8] sm:$0xf]
  %v24 = vld [vmem:[%s0 + $0xc] sm:$0xf]
  %v25 = vld [vmem:[%s1] sm:$0xf]
  %v26 = vld [vmem:[%s1 + $0x4] sm:$0xf]
  %v27 = vld [vmem:[%s1 + $0x8] sm:$0xf]
  %v28 = vld [vmem:[%s2] sm:$0x1]
  %v30 = vlaneseq
  %v31 = vshrl.u32 %v30, 7
  %v32 = vsub.s32 0, %v31
  %v33 = vrot.slane %v28, %v32
  %v39 = vunpack.c.l.b16 %v21
  %v40 = vunpack.c.l.b16 %v22
  %v41 = vunpack.c.l.b16 %v23
  %v42 = vunpack.c.l.b16 %v24
  %v43 = vpack.c.b16 %v40, %v39
  %v44 = vpack.c.b16 %v42, %v41
  %v48 = vunpack.c.l.b16 %v25
  %v49 = vunpack.c.l.b16 %v26
  %v50 = vunpack.c.l.b16 %v27
  %v51 = vpack.c.b16 %v49, %v48
  %v52 = vpack.c.b16 %v50, %v50
  %vm54 = vcmask 195584
  %v56 = vsel %vm54, %v43, 0
  %v59 = vsel %vm54, %v44, 0
  %vm61 = vcmask 1043456
  %v63 = vsel %vm61, %v52, 0
  %65 = vmatprep.subr.bf16.mxu0 0
  %66 = vmatpush1.bf16.msra.mxu0 %v51
  %67 = vmatprep.subr.bf16.mxu0 0
  %68 = vmatpush1.bf16.msra.mxu0 %v63
  %69 = vmatprep.subr.bf16.mxu0 0
  %70 = vmatpush1.bf16.msra.mxu0 0
  %71 = vmatprep.subr.bf16.mxu0 0
  %72 = vmatpush1.bf16.msra.mxu0 0
  %73 = vmatprep.subr.bf16.mxu0 0
  %74 = vmatpush1.bf16.msra.mxu0 0
  %75 = vmatprep.subr.bf16.mxu0 0
  %76 = vmatpush1.bf16.msra.mxu0 0
  %77 = vmatprep.subr.bf16.mxu0 0
  %78 = vmatpush1.bf16.msra.mxu0 0
  %79 = vmatprep.subr.bf16.mxu0 0
  %80 = vmatpush1.bf16.msra.mxu0 0
  %81 = vmatprep.subr.bf16.mxu0 0
  %82 = vmatpush1.bf16.msra.mxu0 0
  %83 = vmatprep.subr.bf16.mxu0 0
  %84 = vmatpush1.bf16.msra.mxu0 0
  %85 = vmatprep.subr.bf16.mxu0 0
  %86 = vmatpush1.bf16.msra.mxu0 0
  %87 = vmatprep.subr.bf16.mxu0 0
  %88 = vmatpush1.bf16.msra.mxu0 0
  %89 = vmatprep.subr.bf16.mxu0 0
  %90 = vmatpush1.bf16.msra.mxu0 0
  %91 = vmatprep.subr.bf16.mxu0 0
  %92 = vmatpush1.bf16.msra.mxu0 0
  %93 = vmatprep.subr.bf16.mxu0 0
  %94 = vmatpush1.bf16.msra.mxu0 0
  %95 = vmatprep.subr.bf16.mxu0 0
  %96 = vmatpush1.bf16.msra.mxu0 0
  %97 = vmatprep.mubr.bf16.mxu0 0
  %98 = vmatmul.mubr.bf16.gmra.mrb[0].mxu0 %v56
  %v99 = vpop.f32.mrb[0].mxu0
  %v100 = vadd.f32 %v33, %v99
  %v101 = vpop.f32.mrb[0].mxu0
  %v102 = vpop.f32.mrb[0].mxu0
  %v103 = vadd.f32 %v33, %v102
  %v104 = vpop.f32.mrb[0].mxu0
  %105 = vmatprep.mubr.bf16.mxu0 0
  %106 = vmatmul.mubr.bf16.gmra.mrb[0].mxu0 %v59
  %v107 = vpop.f32.mrb[0].mxu0
  %v108 = vadd.f32 %v33, %v107
  %v109 = vpop.f32.mrb[0].mxu0
  %v110 = vpop.f32.mrb[0].mxu0
  %v111 = vadd.f32 %v33, %v110
  %v112 = vpop.f32.mrb[0].mxu0
  %113 = vdwg.mxu0
  %v114 = vmax.f32 %v100, 0.0
  %v115 = vmax.f32 %v103, 0.0
  %v116 = vmax.f32 %v108, 0.0
  %v117 = vmax.f32 %v111, 0.0
  %v118 = vpack.c.bf16 %v115, %v114
  %v119 = vpack.c.bf16 %v117, %v116
  %v120 = vld [vmem:[%s3] sm:$0xf]
  %v121 = vld [vmem:[%s3 + $0x4] sm:$0xf]
  %v122 = vld [vmem:[%s3 + $0x8] sm:$0xf]
  %v123 = vld [vmem:[%s3 + $0xc] sm:$0xf]
  %v124 = vld [vmem:[%s3 + $0x10] sm:$0xf]
  %v125 = vld [vmem:[%s3 + $0x14] sm:$0xf]
  %v126 = vld [vmem:[%s3 + $0x18] sm:$0xf]
  %v127 = vld [vmem:[%s3 + $0x1c] sm:$0xf]
  %v128 = vld [vmem:[%s4] sm:$0x1]
  %v130 = vlaneseq
  %v131 = vshrl.u32 %v130, 7
  %v132 = vsub.s32 0, %v131
  %v133 = vrot.slane %v128, %v132
  %v143 = vunpack.c.l.b16 %v120
  %v144 = vunpack.c.l.b16 %v121
  %v145 = vunpack.c.l.b16 %v122
  %v146 = vunpack.c.l.b16 %v123
  %v147 = vunpack.c.l.b16 %v124
  %v148 = vunpack.c.l.b16 %v125
  %v149 = vunpack.c.l.b16 %v126
  %v150 = vunpack.c.l.b16 %v127
  %v151 = vpack.c.b16 %v144, %v143
  %v152 = vpack.c.b16 %v146, %v145
  %v153 = vpack.c.b16 %v148, %v147
  %v154 = vpack.c.b16 %v150, %v149
  %vm159 = vcmask 523264
  %v161 = vsel %vm159, %v118, 0
  %v164 = vsel %vm159, %v119, 0
  %166 = vmatprep.subr.bf16.mxu0 0
  %167 = vmatpush1.bf16.msra.mxu0 %v151
  %168 = vmatprep.subr.bf16.mxu0 0
  %169 = vmatpush1.bf16.msra.mxu0 %v152
  %170 = vmatprep.subr.bf16.mxu0 0
  %171 = vmatpush1.bf16.msra.mxu0 %v153
  %172 = vmatprep.subr.bf16.mxu0 0
  %173 = vmatpush1.bf16.msra.mxu0 %v154
  %174 = vmatprep.subr.bf16.mxu0 0
  %175 = vmatpush1.bf16.msra.mxu0 0
  %176 = vmatprep.subr.bf16.mxu0 0
  %177 = vmatpush1.bf16.msra.mxu0 0
  %178 = vmatprep.subr.bf16.mxu0 0
  %179 = vmatpush1.bf16.msra.mxu0 0
  %180 = vmatprep.subr.bf16.mxu0 0
  %181 = vmatpush1.bf16.msra.mxu0 0
  %182 = vmatprep.subr.bf16.mxu0 0
  %183 = vmatpush1.bf16.msra.mxu0 0
  %184 = vmatprep.subr.bf16.mxu0 0
  %185 = vmatpush1.bf16.msra.mxu0 0
  %186 = vmatprep.subr.bf16.mxu0 0
  %187 = vmatpush1.bf16.msra.mxu0 0
  %188 = vmatprep.subr.bf16.mxu0 0
  %189 = vmatpush1.bf16.msra.mxu0 0
  %190 = vmatprep.subr.bf16.mxu0 0
  %191 = vmatpush1.bf16.msra.mxu0 0
  %192 = vmatprep.subr.bf16.mxu0 0
  %193 = vmatpush1.bf16.msra.mxu0 0
  %194 = vmatprep.subr.bf16.mxu0 0
  %195 = vmatpush1.bf16.msra.mxu0 0
  %196 = vmatprep.subr.bf16.mxu0 0
  %197 = vmatpush1.bf16.msra.mxu0 0
  %198 = vmatprep.mubr.bf16.mxu0 0
  %199 = vmatmul.mubr.bf16.gmra.mrb[0].mxu0 %v161
  %v200 = vpop.f32.mrb[0].mxu0
  %v201 = vadd.f32 %v133, %v200
  %v202 = vpop.f32.mrb[0].mxu0
  %v203 = vpop.f32.mrb[0].mxu0
  %v204 = vadd.f32 %v133, %v203
  %v205 = vpop.f32.mrb[0].mxu0
  %206 = vmatprep.mubr.bf16.mxu0 0
  %207 = vmatmul.mubr.bf16.gmra.mrb[0].mxu0 %v164
  %v208 = vpop.f32.mrb[0].mxu0
  %v209 = vadd.f32 %v133, %v208
  %v210 = vpop.f32.mrb[0].mxu0
  %v211 = vpop.f32.mrb[0].mxu0
  %v212 = vadd.f32 %v133, %v211
  %v213 = vpop.f32.mrb[0].mxu0
  %214 = vdwg.mxu0
  %v215 = vmax.f32 %v201, 0.0
  %v216 = vmax.f32 %v204, 0.0
  %v217 = vmax.f32 %v209, 0.0
  %v218 = vmax.f32 %v212, 0.0
  %vm219 = vcmask 31744
  %220 = vst.msk [vmem:[%s5] sm:$0xff] %vm219, %v215
  %221 = vst.msk [vmem:[%s5 + $0x8] sm:$0xff] %vm219, %v216
  %222 = vst.msk [vmem:[%s5 + $0x10] sm:$0xff] %vm219, %v217
  %223 = vst.msk [vmem:[%s5 + $0x18] sm:$0xff] %vm219, %v218
  // Predicated region
  $region22: #{tpu_custom_call.1} parent=0 // pred_check
    _
  $region23: #{tpu_custom_call.1} parent=0 // pred_check_branch
    %225 = sbr.rel (0) target = $region25
  $region24: #{tpu_custom_call.1} parent=0 // pred_region
    _
  $region25: #{tpu_custom_call.1} parent=0 // pred_fallthru
    _
  // Predicated region
  $region26: #{tpu_custom_call.1} parent=0 // pred_check
    _
  $region27: #{tpu_custom_call.1} parent=0 // pred_check_branch
    %227 = sbr.rel (0) target = $region29
  $region28: #{tpu_custom_call.1} parent=0 // pred_region
    _
  $region29: #{tpu_custom_call.1} parent=0 // pred_fallthru
    _

</llo_original>
